<compile_context>
chip_gen: v6e
topology: v6e:2x2x1
jax: 0.10.0
libtpu: 0.0.40
codegen_flags: <defaults>
</compile_context>

<pallas_src>
import jax
import jax.numpy as jnp
from jax.experimental import pallas as pl
from jax.experimental.pallas import tpu as pltpu

H1, H2, H3, H4 = 128, 64, 32, 16
LANE = 128                 # all intermediates / output kept 128-lane dense
W_EXTRA_ROWS = 3 * LANE    # rows of the packed slab holding (padded) W2, W3, W4


def _round_up(n, m):
    return (n + m - 1) // m * m


# ---------------------------------------------------------------------------
# Kernel
# ---------------------------------------------------------------------------
def encoder_kernel(x_ref, w_ref, b_ref, o_ref):
    """Fused 4-layer MLP encoder, everything 128-lane dense.

    x_ref : (block_b, Dp)       bf16
    w_ref : (Dp + 384, 128)     bf16   rows [0:Dp]=W1, [Dp:Dp+128]=W2pad,
                                       [Dp+128:Dp+256]=W3pad, [Dp+256:Dp+384]=W4pad
    b_ref : (4, 128)            f32    zero-padded biases, one per row
    o_ref : (block_b, 128)      f32    columns [0:16] hold the encoding
    """
    Dp = x_ref.shape[1]

    w1 = w_ref[0:Dp, :]
    w2 = w_ref[Dp:Dp + LANE, :]
    w3 = w_ref[Dp + LANE:Dp + 2 * LANE, :]
    w4 = w_ref[Dp + 2 * LANE:Dp + 3 * LANE, :]

    # Layer 1: (block_b, Dp) @ (Dp, 128) -> f32 accum, bias+ReLU in f32.
    h = jnp.dot(x_ref[...], w1, preferred_element_type=jnp.float32) + b_ref[0:1, :]
    h = jnp.maximum(h, 0.0).astype(jnp.bfloat16)
    # Layer 2 (cols 64:128 of W2pad are zero -> those lanes stay exactly 0).
    h = jnp.dot(h, w2, preferred_element_type=jnp.float32) + b_ref[1:2, :]
    h = jnp.maximum(h, 0.0).astype(jnp.bfloat16)
    # Layer 3.
    h = jnp.dot(h, w3, preferred_element_type=jnp.float32) + b_ref[2:3, :]
    h = jnp.maximum(h, 0.0).astype(jnp.bfloat16)
    # Layer 4 (no activation). Lane-dense f32 store.
    h = jnp.dot(h, w4, preferred_element_type=jnp.float32) + b_ref[3:4, :]
    o_ref[...] = h.astype(o_ref.dtype)


# ---------------------------------------------------------------------------
# Host-side packing / tiling heuristics
# ---------------------------------------------------------------------------
def pack_params(params, Dp):
    """Pack 4 (weight, bias) pairs into one bf16 weight slab + one f32 bias slab."""
    (w1, b1), (w2, b2), (w3, b3), (w4, b4) = params

    def pad2d(a, rows, cols):
        return jnp.zeros((rows, cols), jnp.float32).at[:a.shape[0], :a.shape[1]].set(a)

    w_pack = jnp.concatenate(
        [pad2d(w1, Dp, LANE), pad2d(w2, LANE, LANE),
         pad2d(w3, LANE, LANE), pad2d(w4, LANE, LANE)],
        axis=0).astype(jnp.bfloat16)
    b_pack = jnp.concatenate(
        [pad2d(b1, 1, LANE), pad2d(b2, 1, LANE),
         pad2d(b3, 1, LANE), pad2d(b4, 1, LANE)], axis=0)
    return w_pack, b_pack


def _pick_block_b(B, Dp, budget_bytes):
    """Largest batch tile that (a) gives >=2 grid steps and (b) fits the VMEM budget."""
    w_bytes = 2 * ((Dp + W_EXTRA_ROWS) * LANE * 2 + 4 * LANE * 4)   # dbl-buffered slabs
    per_row = 2 * Dp * 2 + 2 * LANE * 4 + 3 * LANE * 4              # x + out + live h's
    for cand in (1024, 512, 256, 128, 64, 32, 16):                  # bf16-sublane friendly
        if B % cand == 0 and B // cand >= 2 and cand * per_row + w_bytes <= budget_bytes:
            return cand
    return B   # tiny / awkward batch: single grid step (block == full array)


def encoder_forward(x, params, *, block_b=None, vmem_budget_bytes=16 << 20):
    """Run the fused encoder kernel. x: (B, D) float (any float dtype)."""
    B, D = x.shape
    Dp = _round_up(D, 8)   # keep packed-weight row offsets sublane aligned

    xb = x.astype(jnp.bfloat16)
    if Dp != D:
        xb = jnp.pad(xb, ((0, 0), (0, Dp - D)))
    w_pack, b_pack = pack_params(params, Dp)

    if block_b is None:
        block_b = _pick_block_b(B, Dp, vmem_budget_bytes)
    assert B % block_b == 0, (B, block_b)

    est = (block_b * (2 * Dp * 2 + 2 * LANE * 4 + 3 * LANE * 4)
           + 2 * (w_pack.size * 2 + b_pack.size * 4))
    vmem_limit = int(min(max(2 * est, 32 << 20), 56 << 20))   # safe on v5e/v6e/v7x

    grid = (B // block_b,)
    out = pl.pallas_call(
        encoder_kernel,
        out_shape=jax.ShapeDtypeStruct((B, LANE), jnp.float32),
        grid=grid,
        in_specs=[
            pl.BlockSpec((block_b, Dp), lambda i: (i, 0)),
            pl.BlockSpec(w_pack.shape, lambda i: (0, 0)),   # VMEM-resident across steps
            pl.BlockSpec(b_pack.shape, lambda i: (0, 0)),
        ],
        out_specs=pl.BlockSpec((block_b, LANE), lambda i: (i, 0)),
        compiler_params=pltpu.CompilerParams(
            dimension_semantics=("parallel",),
            vmem_limit_bytes=vmem_limit,
        ),
    )(xb, w_pack, b_pack)
    return out[:, :H4]


# ---------------------------------------------------------------------------
# Parameter init + reference
# ---------------------------------------------------------------------------
def init_params(key, input_dim):
    """Deterministic init matching nn.Linear shapes (weights stored as (in, out))."""
    dims = [(input_dim, H1), (H1, H2), (H2, H3), (H3, H4)]
    params = []
    for i, (din, dout) in enumerate(dims):
        kw, kb, key = jax.random.split(jax.random.fold_in(key, i), 3)
        bound = 1.0 / jnp.sqrt(din)
        w = jax.random.uniform(kw, (din, dout), jnp.float32, -bound, bound)
        b = jax.random.uniform(kb, (1, dout), jnp.float32, -bound, bound)
        params.append((w, b))
    return params


def encoder_reference(x, params):
    """Plain-JAX reference with matching numerics (bf16 MXU inputs, f32 accumulation)."""
    h = x.astype(jnp.bfloat16)
    for i, (w, b) in enumerate(params):
        h = jnp.dot(h, w.astype(jnp.bfloat16), preferred_element_type=jnp.float32) + b
        if i < len(params) - 1:
            h = jnp.maximum(h, 0.0).astype(jnp.bfloat16)
    return h


if __name__ == "__main__":
    key = jax.random.PRNGKey(0)
    B, input_dim = 256, 64          # small shapes, but >=2 grid steps (block_b=128)

    kx, kp = jax.random.split(key)
    x = jax.random.normal(kx, (B, input_dim), jnp.float32)
    params = init_params(kp, input_dim)

    out = encoder_forward(x, params)
    out = jax.block_until_ready(out)

    ref = encoder_reference(x, params)
    assert out.shape == (B, H4), out.shape
    assert jnp.allclose(out, ref, atol=1e-2, rtol=1e-2), \
        float(jnp.max(jnp.abs(out - ref)))

    print("KERNEL_OK")
</pallas_src>

<mosaic_0001>
module attributes {stable_mosaic.version = 11 : i64} {
  func.func @encoder_kernel(%arg0: i32, %arg1: memref<128x64xbf16, #tpu.memory_space<vmem>>, %arg2: memref<448x128xbf16, #tpu.memory_space<vmem>>, %arg3: memref<4x128xf32, #tpu.memory_space<vmem>>, %arg4: memref<128x128xf32, #tpu.memory_space<vmem>>) attributes {dimension_semantics = [#tpu.dimension_semantics<parallel>], iteration_bounds = array<i64: 2>, scalar_prefetch = 0 : i64, scratch_operands = 0 : i64, tpu.core_type = #tpu.core_type<tc>, window_params = [{transform_indices = @transform_0, window_bounds = array<i64: 128, 64>}, {pipeline_mode = #tpu.pipeline_mode<synchronous>, transform_indices = @transform_1, window_bounds = array<i64: 448, 128>}, {pipeline_mode = #tpu.pipeline_mode<synchronous>, transform_indices = @transform_2, window_bounds = array<i64: 4, 128>}, {transform_indices = @transform_3, window_bounds = array<i64: 128, 128>}]} {
    %c0 = arith.constant 0 : index
    %c0_0 = arith.constant 0 : index
    %0 = vector.load %arg2[%c0, %c0_0] : memref<448x128xbf16, #tpu.memory_space<vmem>>, vector<64x128xbf16>
    %c64 = arith.constant 64 : index
    %c0_1 = arith.constant 0 : index
    %1 = vector.load %arg2[%c64, %c0_1] : memref<448x128xbf16, #tpu.memory_space<vmem>>, vector<128x128xbf16>
    %c192 = arith.constant 192 : index
    %c0_2 = arith.constant 0 : index
    %2 = vector.load %arg2[%c192, %c0_2] : memref<448x128xbf16, #tpu.memory_space<vmem>>, vector<128x128xbf16>
    %c320 = arith.constant 320 : index
    %c0_3 = arith.constant 0 : index
    %3 = vector.load %arg2[%c320, %c0_3] : memref<448x128xbf16, #tpu.memory_space<vmem>>, vector<128x128xbf16>
    %c0_4 = arith.constant 0 : index
    %c0_5 = arith.constant 0 : index
    %4 = vector.load %arg1[%c0_4, %c0_5] : memref<128x64xbf16, #tpu.memory_space<vmem>>, vector<128x64xbf16>
    %cst = arith.constant dense<0.000000e+00> : vector<128x128xf32>
    %5 = tpu.matmul %4, %0, %cst {dimension_numbers = #tpu.dot_dimension_numbers<[1], [0], [0], [1], [0, 0, 1, 1], [], []>} : vector<128x64xbf16>, vector<64x128xbf16>, vector<128x128xf32> -> vector<128x128xf32>
    %c0_6 = arith.constant 0 : index
    %c0_7 = arith.constant 0 : index
    %6 = vector.load %arg3[%c0_6, %c0_7] : memref<4x128xf32, #tpu.memory_space<vmem>>, vector<1x128xf32>
    %7 = vector.broadcast %6 : vector<1x128xf32> to vector<128x128xf32>
    %8 = arith.addf %5, %7 : vector<128x128xf32>
    %cst_8 = arith.constant 0.000000e+00 : f32
    %9 = vector.broadcast %cst_8 : f32 to vector<128x128xf32>
    %10 = arith.maximumf %8, %9 : vector<128x128xf32>
    %11 = arith.truncf %10 : vector<128x128xf32> to vector<128x128xbf16>
    %cst_9 = arith.constant dense<0.000000e+00> : vector<128x128xf32>
    %12 = tpu.matmul %11, %1, %cst_9 {dimension_numbers = #tpu.dot_dimension_numbers<[1], [0], [0], [1], [0, 0, 1, 1], [], []>} : vector<128x128xbf16>, vector<128x128xbf16>, vector<128x128xf32> -> vector<128x128xf32>
    %c1 = arith.constant 1 : index
    %c0_10 = arith.constant 0 : index
    %13 = vector.load %arg3[%c1, %c0_10] : memref<4x128xf32, #tpu.memory_space<vmem>>, vector<1x128xf32>
    %14 = vector.broadcast %13 : vector<1x128xf32> to vector<128x128xf32>
    %15 = arith.addf %12, %14 : vector<128x128xf32>
    %cst_11 = arith.constant 0.000000e+00 : f32
    %16 = vector.broadcast %cst_11 : f32 to vector<128x128xf32>
    %17 = arith.maximumf %15, %16 : vector<128x128xf32>
    %18 = arith.truncf %17 : vector<128x128xf32> to vector<128x128xbf16>
    %cst_12 = arith.constant dense<0.000000e+00> : vector<128x128xf32>
    %19 = tpu.matmul %18, %2, %cst_12 {dimension_numbers = #tpu.dot_dimension_numbers<[1], [0], [0], [1], [0, 0, 1, 1], [], []>} : vector<128x128xbf16>, vector<128x128xbf16>, vector<128x128xf32> -> vector<128x128xf32>
    %c2 = arith.constant 2 : index
    %c0_13 = arith.constant 0 : index
    %20 = vector.load %arg3[%c2, %c0_13] : memref<4x128xf32, #tpu.memory_space<vmem>>, vector<1x128xf32>
    %21 = vector.broadcast %20 : vector<1x128xf32> to vector<128x128xf32>
    %22 = arith.addf %19, %21 : vector<128x128xf32>
    %cst_14 = arith.constant 0.000000e+00 : f32
    %23 = vector.broadcast %cst_14 : f32 to vector<128x128xf32>
    %24 = arith.maximumf %22, %23 : vector<128x128xf32>
    %25 = arith.truncf %24 : vector<128x128xf32> to vector<128x128xbf16>
    %cst_15 = arith.constant dense<0.000000e+00> : vector<128x128xf32>
    %26 = tpu.matmul %25, %3, %cst_15 {dimension_numbers = #tpu.dot_dimension_numbers<[1], [0], [0], [1], [0, 0, 1, 1], [], []>} : vector<128x128xbf16>, vector<128x128xbf16>, vector<128x128xf32> -> vector<128x128xf32>
    %c3 = arith.constant 3 : index
    %c0_16 = arith.constant 0 : index
    %27 = vector.load %arg3[%c3, %c0_16] : memref<4x128xf32, #tpu.memory_space<vmem>>, vector<1x128xf32>
    %28 = vector.broadcast %27 : vector<1x128xf32> to vector<128x128xf32>
    %29 = arith.addf %26, %28 : vector<128x128xf32>
    %c0_17 = arith.constant 0 : index
    %c0_18 = arith.constant 0 : index
    %30 = vector.load %arg4[%c0_17, %c0_18] : memref<128x128xf32, #tpu.memory_space<vmem>>, vector<128x128xf32>
    tpu.vector_store %arg4[%c0_17, %c0_18], %29 {strides = array<i32>} : memref<128x128xf32, #tpu.memory_space<vmem>>, vector<128x128xf32>,
    return
  }
  func.func @transform_0(%arg0: i32) -> (i32, i32) {
    %c0_i32 = arith.constant 0 : i32
    %c0_i32_0 = arith.constant 0 : i32
    return %arg0, %c0_i32 : i32, i32
  }
  func.func @transform_1(%arg0: i32) -> (i32, i32) {
    %c0_i32 = arith.constant 0 : i32
    %c0_i32_0 = arith.constant 0 : i32
    %c0_i32_1 = arith.constant 0 : i32
    return %c0_i32, %c0_i32_0 : i32, i32
  }
  func.func @transform_2(%arg0: i32) -> (i32, i32) {
    %c0_i32 = arith.constant 0 : i32
    %c0_i32_0 = arith.constant 0 : i32
    %c0_i32_1 = arith.constant 0 : i32
    return %c0_i32, %c0_i32_0 : i32, i32
  }
  func.func @transform_3(%arg0: i32) -> (i32, i32) {
    %c0_i32 = arith.constant 0 : i32
    %c0_i32_0 = arith.constant 0 : i32
    return %arg0, %c0_i32 : i32, i32
  }
}

</mosaic_0001>

<llo_original>
// kernel: tpu_custom_call.1
$region0: #{tpu_custom_call.1}
  #allocation0 [shape = 'u32[]', space=smem, size = 0x4, offset = 0x4, fixed_abs, tag = 'smem constant byte address 0x4 - core index']
  #allocation1 [shape = 'u32[144,128]{1,0:T(1,128)}', space=vmem, size = 0x12000, scoped, tag = 'internal scratch']
  %s0 = inlined_call_operand.vmem [shape: bf16[256,64], index: 0, kind: input, shape index: {}]
  %s1 = inlined_call_operand.hbm [shape: bf16[448,128], index: 1, kind: input, shape index: {}]
  %s2 = inlined_call_operand.vmem [shape: f32[4,128], index: 2, kind: input, shape index: {}]
  %s3 = inlined_call_operand.hbm [shape: f32[256,128], index: 3, kind: output, shape index: {}]
  %s4 = sld [smem:[#allocation0]]
  $region49: #{tpu_custom_call.1} parent=0
    _
  %s6 = ssub.s32 1, %s4
  %s7 = scalar_select 0, %s6, %s4
  $region1: #{tpu_custom_call.1} parent=0
    #allocation2 [shape = 'u8[114688]{0}', space=vmem, size = 0x1c000, scoped, tag = 'input window, operand 1, single buffered']
    #allocation3 [shape = 's32[2]{0}', space=sflag, size = 0x8, scoped, tag = 'scoped memory for tpu_custom_call.1']
    #allocation4 [shape = 's32[2]{0}', space=sflag, size = 0x8, scoped, tag = 'scoped memory for tpu_custom_call.1']
    #allocation5 [shape = 'u8[131072]{0}', space=vmem, size = 0x20000, scoped, tag = 'output window, operand 0']
    %8 = vsyncpa [#allocation3], 0
    %9 = vsyncpa [#allocation4], 0
    %s10 = scalar_lea.sflag [#allocation4], 1
    %11 = vsyncpa %s10, 0
    loop: start=0, step=1, limit=4
    $region2: #{tpu_custom_call.1} parent=1 // loop_pre_header
      _
    $region3: #{tpu_custom_call.1} parent=1 // loop_header
      %s13 = sphi 0, %s17
      %p14 = scmp.ge.s32.totalorder %s13, 4
      %s23 = sphi 0, %s25
      %s26 = sphi 0, %s23
      %s27 = sphi 0, %s26
      %s43 = sphi 0, %s27
      %s47 = sphi 0, %s47
      %s49 = sphi 0, %s47
      %s50 = sphi 0, %s49
      %s64 = sphi 0, %s50
      %s68 = sphi 0, %s68
      %s70 = sphi 0, %s68
      %s71 = sphi 0, %s70
      %s85 = sphi 0, %s71
      %s91 = sphi 0, %s93
      %s94 = sphi 0, %s91
      %s95 = sphi 0, %s94
      %s111 = sphi 0, %s95
    $region4: #{tpu_custom_call.1} parent=1 // loop_header_branch
      %16 = sbr.rel (%p14) target = $region8
    $region5: #{tpu_custom_call.1} parent=1 // loop_body
      %s18 = ssub.s32 %s13, 1
      %s19 = ssub.s32 %s13, 2
      %s20 = sadd.s32 %s13, 1
      %s21 = ssub.s32 %s13, %s20
      %p22 = scmp.eq.s32.totalorder %s21, 0
      %s24 = sadd.s32 %s23, 1
      %s25 = scalar_select %p22, %s23, %s24
      %p28 = pneg %p22
      %p29 = scmp.eq.s32.totalorder %s13, 1
      %p30 = por %p28, %p29
      %p31 = scmp.ne.s32.totalorder %s23, %s26
      %p32 = scmp.eq.s32.totalorder %s13, 0
      %p33 = por %p31, %p32
      %p34 = scmp.ne.s32.totalorder %s23, %s26
      %p35 = scmp.eq.s32.totalorder %s18, 1
      %p36 = por %p34, %p35
      %p37 = scmp.ne.s32.totalorder %s26, %s27
      %p38 = scmp.eq.s32.totalorder %s18, 0
      %p39 = por %p37, %p38
      %p40 = scmp.ne.s32.totalorder %s26, %s27
      %p41 = scmp.eq.s32.totalorder %s19, 1
      %p42 = por %p40, %p41
      %p44 = scmp.ne.s32.totalorder %s27, %s43
      %p45 = scmp.eq.s32.totalorder %s19, 0
      %p46 = por %p44, %p45
      %s48 = sadd.s32 %s47, 1
      %p51 = scmp.eq.s32.totalorder %s13, 1
      %p52 = scmp.ne.s32.totalorder %s47, %s49
      %p53 = scmp.eq.s32.totalorder %s13, 0
      %p54 = por %p52, %p53
      %p55 = scmp.ne.s32.totalorder %s47, %s49
      %p56 = scmp.eq.s32.totalorder %s18, 1
      %p57 = por %p55, %p56
      %p58 = scmp.ne.s32.totalorder %s49, %s50
      %p59 = scmp.eq.s32.totalorder %s18, 0
      %p60 = por %p58, %p59
      %p61 = scmp.ne.s32.totalorder %s49, %s50
      %p62 = scmp.eq.s32.totalorder %s19, 1
      %p63 = por %p61, %p62
      %p65 = scmp.ne.s32.totalorder %s50, %s64
      %p66 = scmp.eq.s32.totalorder %s19, 0
      %p67 = por %p65, %p66
      %s69 = sadd.s32 %s68, 1
      %p72 = scmp.eq.s32.totalorder %s13, 1
      %p73 = scmp.ne.s32.totalorder %s68, %s70
      %p74 = scmp.eq.s32.totalorder %s13, 0
      %p75 = por %p73, %p74
      %p76 = scmp.ne.s32.totalorder %s68, %s70
      %p77 = scmp.eq.s32.totalorder %s18, 1
      %p78 = por %p76, %p77
      %p79 = scmp.ne.s32.totalorder %s70, %s71
      %p80 = scmp.eq.s32.totalorder %s18, 0
      %p81 = por %p79, %p80
      %p82 = scmp.ne.s32.totalorder %s70, %s71
      %p83 = scmp.eq.s32.totalorder %s19, 1
      %p84 = por %p82, %p83
      %p86 = scmp.ne.s32.totalorder %s71, %s85
      %p87 = scmp.eq.s32.totalorder %s19, 0
      %p88 = por %p86, %p87
      %s89 = ssub.s32 %s13, %s20
      %p90 = scmp.eq.s32.totalorder %s89, 0
      %s92 = sadd.s32 %s91, 1
      %s93 = scalar_select %p90, %s91, %s92
      %p96 = pneg %p90
      %p97 = scmp.eq.s32.totalorder %s13, 1
      %p98 = por %p96, %p97
      %p99 = scmp.ne.s32.totalorder %s91, %s94
      %p100 = scmp.eq.s32.totalorder %s13, 0
      %p101 = por %p99, %p100
      %p102 = scmp.ne.s32.totalorder %s91, %s94
      %p103 = scmp.eq.s32.totalorder %s18, 1
      %p104 = por %p102, %p103
      %p105 = scmp.ne.s32.totalorder %s94, %s95
      %p106 = scmp.eq.s32.totalorder %s18, 0
      %p107 = por %p105, %p106
      %p108 = scmp.ne.s32.totalorder %s94, %s95
      %p109 = scmp.eq.s32.totalorder %s19, 1
      %p110 = por %p108, %p109
      %p112 = scmp.ne.s32.totalorder %s95, %s111
      %p113 = scmp.eq.s32.totalorder %s19, 0
      %p114 = por %p112, %p113
      %p115 = scmp.le.s32.totalorder 1, %s13
      %p116 = scmp.lt.s32.totalorder %s13, 3
      %p117 = pnand %p115, %p116
      %p118 = pneg %p117
      // Predicated region
      $region9: #{tpu_custom_call.1} parent=5 // pred_check
        _
      $region10: #{tpu_custom_call.1} parent=5 // pred_check_branch
        %120 = sbr.rel (%p117) target = $region12
      $region11: #{tpu_custom_call.1} parent=5 // pred_region
        %s121 = ssub.s32 %s13, 1
        // Predicated region
        $region13: #{tpu_custom_call.1} parent=11 // pred_check
          %p122 = pneg %p60
        $region14: #{tpu_custom_call.1} parent=11 // pred_check_branch
          %124 = sbr.rel (%p122) target = $region16
        $region15: #{tpu_custom_call.1} parent=11 // pred_region
          %s126 = ssub.s32 3584, 3584
          %127 = vsyncadd [#allocation3], %s126
          %s128 = sshll.u32 [#allocation2], 4
          %s129 = int_to_ptr.vmem [resolvable:$true] %s128
          %134 = dma.hbm_to_vmem [thread:$0]  %s1, 3584, %s129, [#allocation3], 64, 64, 4
        $region16: #{tpu_custom_call.1} parent=11 // pred_fallthru
          _
        // Predicated region
        $region17: #{tpu_custom_call.1} parent=11 // pred_check
          %p135 = pneg %p81
        $region18: #{tpu_custom_call.1} parent=11 // pred_check_branch
          %137 = sbr.rel (%p135) target = $region20
        $region19: #{tpu_custom_call.1} parent=11 // pred_region
          _
        $region20: #{tpu_custom_call.1} parent=11 // pred_fallthru
          _
      $region12: #{tpu_custom_call.1} parent=5 // pred_fallthru
        _
      %p138 = scmp.lt.s32.totalorder %s13, 2
      // Predicated region
      $region21: #{tpu_custom_call.1} parent=5 // pred_check
        %p139 = pneg %p138
      $region22: #{tpu_custom_call.1} parent=5 // pred_check_branch
        %141 = sbr.rel (%p139) target = $region24
      $region23: #{tpu_custom_call.1} parent=5 // pred_region
        // Predicated region
        $region25: #{tpu_custom_call.1} parent=23 // pred_check
          %p142 = pneg %p33
        $region26: #{tpu_custom_call.1} parent=23 // pred_check_branch
          %144 = sbr.rel (%p142) target = $region28
        $region27: #{tpu_custom_call.1} parent=23 // pred_region
          %s145 = smul.u32 16, %s13
          %p146 = scmp.lt.s32.totalorder %s145, 31
          %s147 = scalar_select %p146, %s145, 31
          %s148 = smul.addr %s147, 4
          %s149 = scalar_lea.vmem %s0, %s148
          %s150 = smul.u32 16, %s13
        $region28: #{tpu_custom_call.1} parent=23 // pred_fallthru
          _
      $region24: #{tpu_custom_call.1} parent=5 // pred_fallthru
        _
      %p151 = scmp.le.s32.totalorder 1, %s13
      %p152 = scmp.lt.s32.totalorder %s13, 3
      %p153 = pnand %p151, %p152
      %p154 = pneg %p153
      // Predicated region
      $region29: #{tpu_custom_call.1} parent=5 // pred_check
        _
      $region30: #{tpu_custom_call.1} parent=5 // pred_check_branch
        %156 = sbr.rel (%p153) target = $region32
      $region31: #{tpu_custom_call.1} parent=5 // pred_region
        %s157 = ssub.s32 %s13, 1
        // Predicated region
        $region33: #{tpu_custom_call.1} parent=31 // pred_check
          %p158 = pneg %p60
        $region34: #{tpu_custom_call.1} parent=31 // pred_check_branch
          %160 = sbr.rel (%p158) target = $region36
        $region35: #{tpu_custom_call.1} parent=31 // pred_region
          %161 = dma.done [#allocation3], 3584
        $region36: #{tpu_custom_call.1} parent=31 // pred_fallthru
          _
        %s162 = smul.u32 16, %s18
        %p163 = scmp.lt.s32.totalorder %s162, 31
        %s164 = scalar_select %p163, %s162, 31
        %s165 = smul.addr %s164, 4
        %s166 = scalar_lea.vmem %s0, %s165
        %p167 = pneg %p39
        %p168 = pneg %p36
        %p169 = pneg %p60
        %p170 = pneg %p57
        %p171 = pneg %p81
        %p172 = pneg %p78
        %p173 = pneg %p107
        %p174 = pneg %p104
        %s175 = sand.u32 %s94, 1
        %s176 = scalar_lea.sflag [#allocation4], %s175
        %s177 = sand.u32 %s94, 1
        %s178 = smul.addr %s177, 128
        %s179 = scalar_lea.vmem [#allocation5], %s178
        %s180 = smul.u32 16, %s18
        %p181 = scmp.lt.s32.totalorder %s180, 31
        %s182 = scalar_select %p181, %s180, 31
        %s183 = smul.addr %s182, 4
        %s184 = scalar_lea.vmem %s0, %s183
        %s185 = smul.u32 16, %s18
        %s186 = smul.u32 16, %s18
        %v188 = vld [vmem:[#allocation2] sm:$0xf]
        %v189 = vld [vmem:[#allocation2 + $0x4] sm:$0xf]
        %v190 = vld [vmem:[#allocation2 + $0x8] sm:$0xf]
        %v191 = vld [vmem:[#allocation2 + $0xc] sm:$0xf]
        %v192 = vld [vmem:[#allocation2 + $0x10] sm:$0xf]
        %v193 = vld [vmem:[#allocation2 + $0x14] sm:$0xf]
        %v194 = vld [vmem:[#allocation2 + $0x18] sm:$0xf]
        %v195 = vld [vmem:[#allocation2 + $0x1c] sm:$0xf]
        %v196 = vld [vmem:[#allocation2 + $0x20] sm:$0xf]
        %v197 = vld [vmem:[#allocation2 + $0x24] sm:$0xf]
        %v198 = vld [vmem:[#allocation2 + $0x28] sm:$0xf]
        %v199 = vld [vmem:[#allocation2 + $0x2c] sm:$0xf]
        %v200 = vld [vmem:[#allocation2 + $0x30] sm:$0xf]
        %v201 = vld [vmem:[#allocation2 + $0x34] sm:$0xf]
        %v202 = vld [vmem:[#allocation2 + $0x38] sm:$0xf]
        %v203 = vld [vmem:[#allocation2 + $0x3c] sm:$0xf]
        %v204 = vld [vmem:[#allocation2 + $0x40] sm:$0xf]
        %v205 = vld [vmem:[#allocation2 + $0x44] sm:$0xf]
        %v206 = vld [vmem:[#allocation2 + $0x48] sm:$0xf]
        %v207 = vld [vmem:[#allocation2 + $0x4c] sm:$0xf]
        %v208 = vld [vmem:[#allocation2 + $0x50] sm:$0xf]
        %v209 = vld [vmem:[#allocation2 + $0x54] sm:$0xf]
        %v210 = vld [vmem:[#allocation2 + $0x58] sm:$0xf]
        %v211 = vld [vmem:[#allocation2 + $0x5c] sm:$0xf]
        %v212 = vld [vmem:[#allocation2 + $0x60] sm:$0xf]
        %v213 = vld [vmem:[#allocation2 + $0x64] sm:$0xf]
        %v214 = vld [vmem:[#allocation2 + $0x68] sm:$0xf]
        %v215 = vld [vmem:[#allocation2 + $0x6c] sm:$0xf]
        %v216 = vld [vmem:[#allocation2 + $0x70] sm:$0xf]
        %v217 = vld [vmem:[#allocation2 + $0x74] sm:$0xf]
        %v218 = vld [vmem:[#allocation2 + $0x78] sm:$0xf]
        %v219 = vld [vmem:[#allocation2 + $0x7c] sm:$0xf]
        %v220 = vld [vmem:[#allocation2 + $0x80] sm:$0xf]
        %v221 = vld [vmem:[#allocation2 + $0x84] sm:$0xf]
        %v222 = vld [vmem:[#allocation2 + $0x88] sm:$0xf]
        %v223 = vld [vmem:[#allocation2 + $0x8c] sm:$0xf]
        %v224 = vld [vmem:[#allocation2 + $0x90] sm:$0xf]
        %v225 = vld [vmem:[#allocation2 + $0x94] sm:$0xf]
        %v226 = vld [vmem:[#allocation2 + $0x98] sm:$0xf]
        %v227 = vld [vmem:[#allocation2 + $0x9c] sm:$0xf]
        %v228 = vld [vmem:[#allocation2 + $0xa0] sm:$0xf]
        %v229 = vld [vmem:[#allocation2 + $0xa4] sm:$0xf]
        %v230 = vld [vmem:[#allocation2 + $0xa8] sm:$0xf]
        %v231 = vld [vmem:[#allocation2 + $0xac] sm:$0xf]
        %v232 = vld [vmem:[#allocation2 + $0xb0] sm:$0xf]
        %v233 = vld [vmem:[#allocation2 + $0xb4] sm:$0xf]
        %v234 = vld [vmem:[#allocation2 + $0xb8] sm:$0xf]
        %v235 = vld [vmem:[#allocation2 + $0xbc] sm:$0xf]
        %v236 = vld [vmem:[#allocation2 + $0xc0] sm:$0xf]
        %v237 = vld [vmem:[#allocation2 + $0xc4] sm:$0xf]
        %v238 = vld [vmem:[#allocation2 + $0xc8] sm:$0xf]
        %v239 = vld [vmem:[#allocation2 + $0xcc] sm:$0xf]
        %v240 = vld [vmem:[#allocation2 + $0xd0] sm:$0xf]
        %v241 = vld [vmem:[#allocation2 + $0xd4] sm:$0xf]
        %v242 = vld [vmem:[#allocation2 + $0xd8] sm:$0xf]
        %v243 = vld [vmem:[#allocation2 + $0xdc] sm:$0xf]
        %v244 = vld [vmem:[%s184] sm:$0xf]
        %v245 = vld [vmem:[%s184 + $0x4] sm:$0xf]
        %v246 = vld [vmem:[%s184 + $0x8] sm:$0xf]
        %v247 = vld [vmem:[%s184 + $0xc] sm:$0xf]
        %v248 = vld [vmem:[%s184 + $0x10] sm:$0xf]
        %v249 = vld [vmem:[%s184 + $0x14] sm:$0xf]
        %v250 = vld [vmem:[%s184 + $0x18] sm:$0xf]
        %v251 = vld [vmem:[%s184 + $0x1c] sm:$0xf]
        %v252 = vld [vmem:[%s184 + $0x20] sm:$0xf]
        %v253 = vld [vmem:[%s184 + $0x24] sm:$0xf]
        %v254 = vld [vmem:[%s184 + $0x28] sm:$0xf]
        %v255 = vld [vmem:[%s184 + $0x2c] sm:$0xf]
        %v256 = vld [vmem:[%s184 + $0x30] sm:$0xf]
        %v257 = vld [vmem:[%s184 + $0x34] sm:$0xf]
        %v258 = vld [vmem:[%s184 + $0x38] sm:$0xf]
        %v259 = vld [vmem:[%s184 + $0x3c] sm:$0xf]
        %v260 = vld [vmem:[%s2] sm:$0x1]
        %v261 = vlaneseq
        %v262 = vshrl.u32 %v261, 7
        %v263 = vsub.s32 0, %v262
        %v264 = vrot.slane %v260, %v263
        %v281 = vunpack.c.l.b16 %v244
        %v282 = vunpack.c.l.b16 %v245
        %v283 = vunpack.c.l.b16 %v246
        %v284 = vunpack.c.l.b16 %v247
        %v285 = vunpack.c.l.b16 %v248
        %v286 = vunpack.c.l.b16 %v249
        %v287 = vunpack.c.l.b16 %v250
        %v288 = vunpack.c.l.b16 %v251
        %v289 = vunpack.c.l.b16 %v252
        %v290 = vunpack.c.l.b16 %v253
        %v291 = vunpack.c.l.b16 %v254
        %v292 = vunpack.c.l.b16 %v255
        %v293 = vunpack.c.l.b16 %v256
        %v294 = vunpack.c.l.b16 %v257
        %v295 = vunpack.c.l.b16 %v258
        %v296 = vunpack.c.l.b16 %v259
        %v297 = vpack.c.b16 %v282, %v281
        %v298 = vpack.c.b16 %v284, %v283
        %v299 = vpack.c.b16 %v286, %v285
        %v300 = vpack.c.b16 %v288, %v287
        %v301 = vpack.c.b16 %v290, %v289
        %v302 = vpack.c.b16 %v292, %v291
        %v303 = vpack.c.b16 %v294, %v293
        %v304 = vpack.c.b16 %v296, %v295
        %v313 = vunpack.c.l.b16 %v188
        %v314 = vunpack.c.l.b16 %v189
        %v315 = vunpack.c.l.b16 %v190
        %v316 = vunpack.c.l.b16 %v191
        %v317 = vunpack.c.l.b16 %v192
        %v318 = vunpack.c.l.b16 %v193
        %v319 = vunpack.c.l.b16 %v194
        %v320 = vunpack.c.l.b16 %v195
        %v321 = vpack.c.b16 %v314, %v313
        %v322 = vpack.c.b16 %v316, %v315
        %v323 = vpack.c.b16 %v318, %v317
        %v324 = vpack.c.b16 %v320, %v319
        %vm329 = vcmask 523264
        %v331 = vsel %vm329, %v297, 0
        %v334 = vsel %vm329, %v298, 0
        %v337 = vsel %vm329, %v299, 0
        %v340 = vsel %vm329, %v300, 0
        %v343 = vsel %vm329, %v301, 0
        %v346 = vsel %vm329, %v302, 0
        %v349 = vsel %vm329, %v303, 0
        %v352 = vsel %vm329, %v304, 0
        %354 = vmatprep.subr.bf16.mxu0 0
        %355 = vmatpush1.bf16.msra.mxu0 0
        %356 = vmatprep.subr.bf16.mxu0 0
        %357 = vmatpush1.bf16.msra.mxu0 0
        %358 = vmatprep.subr.bf16.mxu0 0
        %359 = vmatpush1.bf16.msra.mxu0 0
        %360 = vmatprep.subr.bf16.mxu0 0
        %361 = vmatpush1.bf16.msra.mxu0 0
        %362 = vmatprep.subr.bf16.mxu0 0
        %363 = vmatpush1.bf16.msra.mxu0 %v324
        %364 = vmatprep.subr.bf16.mxu0 0
        %365 = vmatpush1.bf16.msra.mxu0 %v323
        %366 = vmatprep.subr.bf16.mxu0 0
        %367 = vmatpush1.bf16.msra.mxu0 %v322
        %368 = vmatprep.subr.bf16.mxu0 0
        %369 = vmatpush1.bf16.msra.mxu0 %v321
        %370 = vmatprep.subr.bf16.mxu0 0
        %371 = vmatpush2.bf16.msra.mxu0 0
        %372 = vmatprep.subr.bf16.mxu0 0
        %373 = vmatpush2.bf16.msra.mxu0 0
        %374 = vmatprep.subr.bf16.mxu0 0
        %375 = vmatpush2.bf16.msra.mxu0 0
        %376 = vmatprep.subr.bf16.mxu0 0
        %377 = vmatpush2.bf16.msra.mxu0 0
        %378 = vmatprep.subr.bf16.mxu0 0
        %379 = vmatpush2.bf16.msra.mxu0 0
        %380 = vmatprep.subr.bf16.mxu0 0
        %381 = vmatpush2.bf16.msra.mxu0 0
        %382 = vmatprep.subr.bf16.mxu0 0
        %383 = vmatpush2.bf16.msra.mxu0 0
        %384 = vmatprep.subr.bf16.mxu0 0
        %385 = vmatpush2.bf16.msra.mxu0 0
        %386 = vmatprep.mubr.bf16.mxu0 0
        %387 = vmatmul.mubr.bf16.gmra.mxu0 %v331
        %v388 = vpop.f32.mrf.mxu0
        %v389 = vadd.f32 %v264, %v388
        %v390 = vpop.f32.mrf.mxu0
        %v391 = vpop.f32.mrf.mxu0
        %v392 = vadd.f32 %v264, %v391
        %v393 = vpop.f32.mrf.mxu0
        %394 = vmatprep.mubr.bf16.mxu0 0
        %395 = vmatmul.mubr.bf16.gmra.mxu0 %v334
        %v396 = vpop.f32.mrf.mxu0
        %v397 = vadd.f32 %v264, %v396
        %v398 = vpop.f32.mrf.mxu0
        %v399 = vpop.f32.mrf.mxu0
        %v400 = vadd.f32 %v264, %v399
        %v401 = vpop.f32.mrf.mxu0
        %402 = vmatprep.mubr.bf16.mxu0 0
        %403 = vmatmul.mubr.bf16.gmra.mxu0 %v337
        %v404 = vpop.f32.mrf.mxu0
        %v405 = vadd.f32 %v264, %v404
        %v406 = vpop.f32.mrf.mxu0
        %v407 = vpop.f32.mrf.mxu0
        %v408 = vadd.f32 %v264, %v407
        %v409 = vpop.f32.mrf.mxu0
        %410 = vmatprep.mubr.bf16.mxu0 0
        %411 = vmatmul.mubr.bf16.gmra.mxu0 %v340
        %v412 = vpop.f32.mrf.mxu0
        %v413 = vadd.f32 %v264, %v412
        %v414 = vpop.f32.mrf.mxu0
        %v415 = vpop.f32.mrf.mxu0
        %v416 = vadd.f32 %v264, %v415
        %v417 = vpop.f32.mrf.mxu0
        %418 = vmatprep.mubr.bf16.mxu0 0
        %419 = vmatmul.mubr.bf16.gmra.mxu0 %v343
        %v420 = vpop.f32.mrf.mxu0
        %v421 = vadd.f32 %v264, %v420
        %v422 = vpop.f32.mrf.mxu0
        %v423 = vpop.f32.mrf.mxu0
        %v424 = vadd.f32 %v264, %v423
        %v425 = vpop.f32.mrf.mxu0
        %426 = vmatprep.mubr.bf16.mxu0 0
        %427 = vmatmul.mubr.bf16.gmra.mxu0 %v346
        %v428 = vpop.f32.mrf.mxu0
        %v429 = vadd.f32 %v264, %v428
        %v430 = vpop.f32.mrf.mxu0
        %v431 = vpop.f32.mrf.mxu0
        %v432 = vadd.f32 %v264, %v431
        %v433 = vpop.f32.mrf.mxu0
        %434 = vmatprep.mubr.bf16.mxu0 0
        %435 = vmatmul.mubr.bf16.gmra.mxu0 %v349
        %v436 = vpop.f32.mrf.mxu0
        %v437 = vadd.f32 %v264, %v436
        %v438 = vpop.f32.mrf.mxu0
        %v439 = vpop.f32.mrf.mxu0
        %v440 = vadd.f32 %v264, %v439
        %v441 = vpop.f32.mrf.mxu0
        %442 = vmatprep.mubr.bf16.mxu0 0
        %443 = vmatmul.mubr.bf16.gmra.mxu0 %v352
        %v444 = vpop.f32.mrf.mxu0
        %v445 = vadd.f32 %v264, %v444
        %v446 = vpop.f32.mrf.mxu0
        %v447 = vpop.f32.mrf.mxu0
        %v448 = vadd.f32 %v264, %v447
        %v449 = vpop.f32.mrf.mxu0
        %450 = vdwg.mxu0
        %v451 = vmax.f32 %v389, 0.0
        %v452 = vmax.f32 %v392, 0.0
        %v453 = vmax.f32 %v397, 0.0
        %v454 = vmax.f32 %v400, 0.0
        %v455 = vmax.f32 %v405, 0.0
        %v456 = vmax.f32 %v408, 0.0
        %v457 = vmax.f32 %v413, 0.0
        %v458 = vmax.f32 %v416, 0.0
        %v459 = vmax.f32 %v421, 0.0
        %v460 = vmax.f32 %v424, 0.0
        %v461 = vmax.f32 %v429, 0.0
        %v462 = vmax.f32 %v432, 0.0
        %v463 = vmax.f32 %v437, 0.0
        %v464 = vmax.f32 %v440, 0.0
        %v465 = vmax.f32 %v445, 0.0
        %v466 = vmax.f32 %v448, 0.0
        %v467 = vpack.c.bf16 %v452, %v451
        %v468 = vpack.c.bf16 %v454, %v453
        %v469 = vpack.c.bf16 %v456, %v455
        %v470 = vpack.c.bf16 %v458, %v457
        %v471 = vpack.c.bf16 %v460, %v459
        %v472 = vpack.c.bf16 %v462, %v461
        %v473 = vpack.c.bf16 %v464, %v463
        %v474 = vpack.c.bf16 %v466, %v465
        %v475 = vld [vmem:[%s2 + $0x1] sm:$0x1]
        %v476 = vlaneseq
        %v477 = vshrl.u32 %v476, 7
        %v478 = vsub.s32 0, %v477
        %v479 = vrot.slane %v475, %v478
        %v496 = vunpack.c.l.b16 %v196
        %v497 = vunpack.c.l.b16 %v197
        %v498 = vunpack.c.l.b16 %v198
        %v499 = vunpack.c.l.b16 %v199
        %v500 = vunpack.c.l.b16 %v200
        %v501 = vunpack.c.l.b16 %v201
        %v502 = vunpack.c.l.b16 %v202
        %v503 = vunpack.c.l.b16 %v203
        %v504 = vunpack.c.l.b16 %v204
        %v505 = vunpack.c.l.b16 %v205
        %v506 = vunpack.c.l.b16 %v206
        %v507 = vunpack.c.l.b16 %v207
        %v508 = vunpack.c.l.b16 %v208
        %v509 = vunpack.c.l.b16 %v209
        %v510 = vunpack.c.l.b16 %v210
        %v511 = vunpack.c.l.b16 %v211
        %v512 = vpack.c.b16 %v497, %v496
        %v513 = vpack.c.b16 %v499, %v498
        %v514 = vpack.c.b16 %v501, %v500
        %v515 = vpack.c.b16 %v503, %v502
        %v516 = vpack.c.b16 %v505, %v504
        %v517 = vpack.c.b16 %v507, %v506
        %v518 = vpack.c.b16 %v509, %v508
        %v519 = vpack.c.b16 %v511, %v510
        %528 = vmatprep.subr.bf16.mxu0 0
        %529 = vmatpush1.bf16.msra.mxu0 %v519
        %530 = vmatprep.subr.bf16.mxu0 0
        %531 = vmatpush1.bf16.msra.mxu0 %v518
        %532 = vmatprep.subr.bf16.mxu0 0
        %533 = vmatpush1.bf16.msra.mxu0 %v517
        %534 = vmatprep.subr.bf16.mxu0 0
        %535 = vmatpush1.bf16.msra.mxu0 %v516
        %536 = vmatprep.subr.bf16.mxu0 0
        %537 = vmatpush1.bf16.msra.mxu0 %v515
        %538 = vmatprep.subr.bf16.mxu0 0
        %539 = vmatpush1.bf16.msra.mxu0 %v514
        %540 = vmatprep.subr.bf16.mxu0 0
        %541 = vmatpush1.bf16.msra.mxu0 %v513
        %542 = vmatprep.subr.bf16.mxu0 0
        %543 = vmatpush1.bf16.msra.mxu0 %v512
        %544 = vmatprep.subr.bf16.mxu0 0
        %545 = vmatpush2.bf16.msra.mxu0 0
        %546 = vmatprep.subr.bf16.mxu0 0
        %547 = vmatpush2.bf16.msra.mxu0 0
        %548 = vmatprep.subr.bf16.mxu0 0
        %549 = vmatpush2.bf16.msra.mxu0 0
        %550 = vmatprep.subr.bf16.mxu0 0
        %551 = vmatpush2.bf16.msra.mxu0 0
        %552 = vmatprep.subr.bf16.mxu0 0
        %553 = vmatpush2.bf16.msra.mxu0 0
        %554 = vmatprep.subr.bf16.mxu0 0
        %555 = vmatpush2.bf16.msra.mxu0 0
        %556 = vmatprep.subr.bf16.mxu0 0
        %557 = vmatpush2.bf16.msra.mxu0 0
        %558 = vmatprep.subr.bf16.mxu0 0
        %559 = vmatpush2.bf16.msra.mxu0 0
        %560 = vmatprep.mubr.bf16.mxu0 0
        %561 = vmatmul.mubr.bf16.gmra.mxu0 %v467
        %v562 = vpop.f32.mrf.mxu0
        %v563 = vadd.f32 %v479, %v562
        %v564 = vpop.f32.mrf.mxu0
        %v565 = vpop.f32.mrf.mxu0
        %v566 = vadd.f32 %v479, %v565
        %v567 = vpop.f32.mrf.mxu0
        %568 = vmatprep.mubr.bf16.mxu0 0
        %569 = vmatmul.mubr.bf16.gmra.mxu0 %v468
        %v570 = vpop.f32.mrf.mxu0
        %v571 = vadd.f32 %v479, %v570
        %v572 = vpop.f32.mrf.mxu0
        %v573 = vpop.f32.mrf.mxu0
        %v574 = vadd.f32 %v479, %v573
        %v575 = vpop.f32.mrf.mxu0
        %576 = vmatprep.mubr.bf16.mxu0 0
        %577 = vmatmul.mubr.bf16.gmra.mxu0 %v469
        %v578 = vpop.f32.mrf.mxu0
        %v579 = vadd.f32 %v479, %v578
        %v580 = vpop.f32.mrf.mxu0
        %v581 = vpop.f32.mrf.mxu0
        %v582 = vadd.f32 %v479, %v581
        %v583 = vpop.f32.mrf.mxu0
        %584 = vmatprep.mubr.bf16.mxu0 0
        %585 = vmatmul.mubr.bf16.gmra.mxu0 %v470
        %v586 = vpop.f32.mrf.mxu0
        %v587 = vadd.f32 %v479, %v586
        %v588 = vpop.f32.mrf.mxu0
        %v589 = vpop.f32.mrf.mxu0
        %v590 = vadd.f32 %v479, %v589
        %v591 = vpop.f32.mrf.mxu0
        %592 = vmatprep.mubr.bf16.mxu0 0
        %593 = vmatmul.mubr.bf16.gmra.mxu0 %v471
        %v594 = vpop.f32.mrf.mxu0
        %v595 = vadd.f32 %v479, %v594
        %v596 = vpop.f32.mrf.mxu0
        %v597 = vpop.f32.mrf.mxu0
        %v598 = vadd.f32 %v479, %v597
        %v599 = vpop.f32.mrf.mxu0
        %600 = vmatprep.mubr.bf16.mxu0 0
        %601 = vmatmul.mubr.bf16.gmra.mxu0 %v472
        %v602 = vpop.f32.mrf.mxu0
        %v603 = vadd.f32 %v479, %v602
        %v604 = vpop.f32.mrf.mxu0
        %v605 = vpop.f32.mrf.mxu0
        %v606 = vadd.f32 %v479, %v605
        %v607 = vpop.f32.mrf.mxu0
        %608 = vmatprep.mubr.bf16.mxu0 0
        %609 = vmatmul.mubr.bf16.gmra.mxu0 %v473
        %v610 = vpop.f32.mrf.mxu0
        %v611 = vadd.f32 %v479, %v610
        %v612 = vpop.f32.mrf.mxu0
        %v613 = vpop.f32.mrf.mxu0
        %v614 = vadd.f32 %v479, %v613
        %v615 = vpop.f32.mrf.mxu0
        %616 = vmatprep.mubr.bf16.mxu0 0
        %617 = vmatmul.mubr.bf16.gmra.mxu0 %v474
        %v618 = vpop.f32.mrf.mxu0
        %v619 = vadd.f32 %v479, %v618
        %v620 = vpop.f32.mrf.mxu0
        %v621 = vpop.f32.mrf.mxu0
        %v622 = vadd.f32 %v479, %v621
        %v623 = vpop.f32.mrf.mxu0
        %624 = vdwg.mxu0
        %v625 = vmax.f32 %v563, 0.0
        %v626 = vmax.f32 %v566, 0.0
        %v627 = vmax.f32 %v571, 0.0
        %v628 = vmax.f32 %v574, 0.0
        %v629 = vmax.f32 %v579, 0.0
        %v630 = vmax.f32 %v582, 0.0
        %v631 = vmax.f32 %v587, 0.0
        %v632 = vmax.f32 %v590, 0.0
        %v633 = vmax.f32 %v595, 0.0
        %v634 = vmax.f32 %v598, 0.0
        %v635 = vmax.f32 %v603, 0.0
        %v636 = vmax.f32 %v606, 0.0
        %v637 = vmax.f32 %v611, 0.0
        %v638 = vmax.f32 %v614, 0.0
        %v639 = vmax.f32 %v619, 0.0
        %v640 = vmax.f32 %v622, 0.0
        %v641 = vpack.c.bf16 %v626, %v625
        %v642 = vpack.c.bf16 %v628, %v627
        %v643 = vpack.c.bf16 %v630, %v629
        %v644 = vpack.c.bf16 %v632, %v631
        %v645 = vpack.c.bf16 %v634, %v633
        %v646 = vpack.c.bf16 %v636, %v635
        %v647 = vpack.c.bf16 %v638, %v637
        %v648 = vpack.c.bf16 %v640, %v639
        %v649 = vld [vmem:[%s2 + $0x2] sm:$0x1]
        %v650 = vlaneseq
        %v651 = vshrl.u32 %v650, 7
        %v652 = vsub.s32 0, %v651
        %v653 = vrot.slane %v649, %v652
        %v670 = vunpack.c.l.b16 %v212
        %v671 = vunpack.c.l.b16 %v213
        %v672 = vunpack.c.l.b16 %v214
        %v673 = vunpack.c.l.b16 %v215
        %v674 = vunpack.c.l.b16 %v216
        %v675 = vunpack.c.l.b16 %v217
        %v676 = vunpack.c.l.b16 %v218
        %v677 = vunpack.c.l.b16 %v219
        %v678 = vunpack.c.l.b16 %v220
        %v679 = vunpack.c.l.b16 %v221
        %v680 = vunpack.c.l.b16 %v222
        %v681 = vunpack.c.l.b16 %v223
        %v682 = vunpack.c.l.b16 %v224
        %v683 = vunpack.c.l.b16 %v225
        %v684 = vunpack.c.l.b16 %v226
        %v685 = vunpack.c.l.b16 %v227
        %v686 = vpack.c.b16 %v671, %v670
        %v687 = vpack.c.b16 %v673, %v672
        %v688 = vpack.c.b16 %v675, %v674
        %v689 = vpack.c.b16 %v677, %v676
        %v690 = vpack.c.b16 %v679, %v678
        %v691 = vpack.c.b16 %v681, %v680
        %v692 = vpack.c.b16 %v683, %v682
        %v693 = vpack.c.b16 %v685, %v684
        %702 = vmatprep.subr.bf16.mxu0 0
        %703 = vmatpush1.bf16.msra.mxu0 %v693
        %704 = vmatprep.subr.bf16.mxu0 0
        %705 = vmatpush1.bf16.msra.mxu0 %v692
        %706 = vmatprep.subr.bf16.mxu0 0
        %707 = vmatpush1.bf16.msra.mxu0 %v691
        %708 = vmatprep.subr.bf16.mxu0 0
        %709 = vmatpush1.bf16.msra.mxu0 %v690
        %710 = vmatprep.subr.bf16.mxu0 0
        %711 = vmatpush1.bf16.msra.mxu0 %v689
        %712 = vmatprep.subr.bf16.mxu0 0
        %713 = vmatpush1.bf16.msra.mxu0 %v688
        %714 = vmatprep.subr.bf16.mxu0 0
        %715 = vmatpush1.bf16.msra.mxu0 %v687
        %716 = vmatprep.subr.bf16.mxu0 0
        %717 = vmatpush1.bf16.msra.mxu0 %v686
        %718 = vmatprep.subr.bf16.mxu0 0
        %719 = vmatpush2.bf16.msra.mxu0 0
        %720 = vmatprep.subr.bf16.mxu0 0
        %721 = vmatpush2.bf16.msra.mxu0 0
        %722 = vmatprep.subr.bf16.mxu0 0
        %723 = vmatpush2.bf16.msra.mxu0 0
        %724 = vmatprep.subr.bf16.mxu0 0
        %725 = vmatpush2.bf16.msra.mxu0 0
        %726 = vmatprep.subr.bf16.mxu0 0
        %727 = vmatpush2.bf16.msra.mxu0 0
        %728 = vmatprep.subr.bf16.mxu0 0
        %729 = vmatpush2.bf16.msra.mxu0 0
        %730 = vmatprep.subr.bf16.mxu0 0
        %731 = vmatpush2.bf16.msra.mxu0 0
        %732 = vmatprep.subr.bf16.mxu0 0
        %733 = vmatpush2.bf16.msra.mxu0 0
        %734 = vmatprep.mubr.bf16.mxu0 0
        %735 = vmatmul.mubr.bf16.gmra.mxu0 %v641
        %v736 = vpop.f32.mrf.mxu0
        %v737 = vadd.f32 %v653, %v736
        %v738 = vpop.f32.mrf.mxu0
        %v739 = vpop.f32.mrf.mxu0
        %v740 = vadd.f32 %v653, %v739
        %v741 = vpop.f32.mrf.mxu0
        %742 = vmatprep.mubr.bf16.mxu0 0
        %743 = vmatmul.mubr.bf16.gmra.mxu0 %v642
        %v744 = vpop.f32.mrf.mxu0
        %v745 = vadd.f32 %v653, %v744
        %v746 = vpop.f32.mrf.mxu0
        %v747 = vpop.f32.mrf.mxu0
        %v748 = vadd.f32 %v653, %v747
        %v749 = vpop.f32.mrf.mxu0
        %750 = vmatprep.mubr.bf16.mxu0 0
        %751 = vmatmul.mubr.bf16.gmra.mxu0 %v643
        %v752 = vpop.f32.mrf.mxu0
        %v753 = vadd.f32 %v653, %v752
        %v754 = vpop.f32.mrf.mxu0
        %v755 = vpop.f32.mrf.mxu0
        %v756 = vadd.f32 %v653, %v755
        %v757 = vpop.f32.mrf.mxu0
        %758 = vmatprep.mubr.bf16.mxu0 0
        %759 = vmatmul.mubr.bf16.gmra.mxu0 %v644
        %v760 = vpop.f32.mrf.mxu0
        %v761 = vadd.f32 %v653, %v760
        %v762 = vpop.f32.mrf.mxu0
        %v763 = vpop.f32.mrf.mxu0
        %v764 = vadd.f32 %v653, %v763
        %v765 = vpop.f32.mrf.mxu0
        %766 = vmatprep.mubr.bf16.mxu0 0
        %767 = vmatmul.mubr.bf16.gmra.mxu0 %v645
        %v768 = vpop.f32.mrf.mxu0
        %v769 = vadd.f32 %v653, %v768
        %v770 = vpop.f32.mrf.mxu0
        %v771 = vpop.f32.mrf.mxu0
        %v772 = vadd.f32 %v653, %v771
        %v773 = vpop.f32.mrf.mxu0
        %774 = vmatprep.mubr.bf16.mxu0 0
        %775 = vmatmul.mubr.bf16.gmra.mxu0 %v646
        %v776 = vpop.f32.mrf.mxu0
        %v777 = vadd.f32 %v653, %v776
        %v778 = vpop.f32.mrf.mxu0
        %v779 = vpop.f32.mrf.mxu0
        %v780 = vadd.f32 %v653, %v779
        %v781 = vpop.f32.mrf.mxu0
        %782 = vmatprep.mubr.bf16.mxu0 0
        %783 = vmatmul.mubr.bf16.gmra.mxu0 %v647
        %v784 = vpop.f32.mrf.mxu0
        %v785 = vadd.f32 %v653, %v784
        %v786 = vpop.f32.mrf.mxu0
        %v787 = vpop.f32.mrf.mxu0
        %v788 = vadd.f32 %v653, %v787
        %v789 = vpop.f32.mrf.mxu0
        %790 = vmatprep.mubr.bf16.mxu0 0
        %791 = vmatmul.mubr.bf16.gmra.mxu0 %v648
        %v792 = vpop.f32.mrf.mxu0
        %v793 = vadd.f32 %v653, %v792
        %v794 = vpop.f32.mrf.mxu0
        %v795 = vpop.f32.mrf.mxu0
        %v796 = vadd.f32 %v653, %v795
        %v797 = vpop.f32.mrf.mxu0
        %798 = vdwg.mxu0
        %v799 = vmax.f32 %v737, 0.0
        %v800 = vmax.f32 %v740, 0.0
        %v801 = vmax.f32 %v745, 0.0
        %v802 = vmax.f32 %v748, 0.0
        %v803 = vmax.f32 %v753, 0.0
        %v804 = vmax.f32 %v756, 0.0
        %v805 = vmax.f32 %v761, 0.0
        %v806 = vmax.f32 %v764, 0.0
        %v807 = vmax.f32 %v769, 0.0
        %v808 = vmax.f32 %v772, 0.0
        %v809 = vmax.f32 %v777, 0.0
        %v810 = vmax.f32 %v780, 0.0
        %v811 = vmax.f32 %v785, 0.0
        %v812 = vmax.f32 %v788, 0.0
        %v813 = vmax.f32 %v793, 0.0
        %v814 = vmax.f32 %v796, 0.0
        %v815 = vpack.c.bf16 %v800, %v799
        %v816 = vpack.c.bf16 %v802, %v801
        %v817 = vpack.c.bf16 %v804, %v803
        %v818 = vpack.c.bf16 %v806, %v805
        %v819 = vpack.c.bf16 %v808, %v807
        %v820 = vpack.c.bf16 %v810, %v809
        %v821 = vpack.c.bf16 %v812, %v811
        %v822 = vpack.c.bf16 %v814, %v813
        %v823 = vld [vmem:[%s2 + $0x3] sm:$0x1]
        %v824 = vlaneseq
        %v825 = vshrl.u32 %v824, 7
        %v826 = vsub.s32 0, %v825
        %v827 = vrot.slane %v823, %v826
        %v844 = vunpack.c.l.b16 %v228
        %v845 = vunpack.c.l.b16 %v229
        %v846 = vunpack.c.l.b16 %v230
        %v847 = vunpack.c.l.b16 %v231
        %v848 = vunpack.c.l.b16 %v232
        %v849 = vunpack.c.l.b16 %v233
        %v850 = vunpack.c.l.b16 %v234
        %v851 = vunpack.c.l.b16 %v235
        %v852 = vunpack.c.l.b16 %v236
        %v853 = vunpack.c.l.b16 %v237
        %v854 = vunpack.c.l.b16 %v238
        %v855 = vunpack.c.l.b16 %v239
        %v856 = vunpack.c.l.b16 %v240
        %v857 = vunpack.c.l.b16 %v241
        %v858 = vunpack.c.l.b16 %v242
        %v859 = vunpack.c.l.b16 %v243
        %v860 = vpack.c.b16 %v845, %v844
        %v861 = vpack.c.b16 %v847, %v846
        %v862 = vpack.c.b16 %v849, %v848
        %v863 = vpack.c.b16 %v851, %v850
        %v864 = vpack.c.b16 %v853, %v852
        %v865 = vpack.c.b16 %v855, %v854
        %v866 = vpack.c.b16 %v857, %v856
        %v867 = vpack.c.b16 %v859, %v858
        %876 = vmatprep.subr.bf16.mxu0 0
        %877 = vmatpush1.bf16.msra.mxu0 %v867
        %878 = vmatprep.subr.bf16.mxu0 0
        %879 = vmatpush1.bf16.msra.mxu0 %v866
        %880 = vmatprep.subr.bf16.mxu0 0
        %881 = vmatpush1.bf16.msra.mxu0 %v865
        %882 = vmatprep.subr.bf16.mxu0 0
        %883 = vmatpush1.bf16.msra.mxu0 %v864
        %884 = vmatprep.subr.bf16.mxu0 0
        %885 = vmatpush1.bf16.msra.mxu0 %v863
        %886 = vmatprep.subr.bf16.mxu0 0
        %887 = vmatpush1.bf16.msra.mxu0 %v862
        %888 = vmatprep.subr.bf16.mxu0 0
        %889 = vmatpush1.bf16.msra.mxu0 %v861
        %890 = vmatprep.subr.bf16.mxu0 0
        %891 = vmatpush1.bf16.msra.mxu0 %v860
        %892 = vmatprep.subr.bf16.mxu0 0
        %893 = vmatpush2.bf16.msra.mxu0 0
        %894 = vmatprep.subr.bf16.mxu0 0
        %895 = vmatpush2.bf16.msra.mxu0 0
        %896 = vmatprep.subr.bf16.mxu0 0
        %897 = vmatpush2.bf16.msra.mxu0 0
        %898 = vmatprep.subr.bf16.mxu0 0
        %899 = vmatpush2.bf16.msra.mxu0 0
        %900 = vmatprep.subr.bf16.mxu0 0
        %901 = vmatpush2.bf16.msra.mxu0 0
        %902 = vmatprep.subr.bf16.mxu0 0
        %903 = vmatpush2.bf16.msra.mxu0 0
        %904 = vmatprep.subr.bf16.mxu0 0
        %905 = vmatpush2.bf16.msra.mxu0 0
        %906 = vmatprep.subr.bf16.mxu0 0
        %907 = vmatpush2.bf16.msra.mxu0 0
        %908 = vmatprep.mubr.bf16.mxu0 0
        %909 = vmatmul.mubr.bf16.gmra.mxu0 %v815
        %v910 = vpop.f32.mrf.mxu0
        %v911 = vadd.f32 %v827, %v910
        %v912 = vpop.f32.mrf.mxu0
        %v913 = vpop.f32.mrf.mxu0
        %v914 = vadd.f32 %v827, %v913
        %v915 = vpop.f32.mrf.mxu0
        %916 = vmatprep.mubr.bf16.mxu0 0
        %917 = vmatmul.mubr.bf16.gmra.mxu0 %v816
        %v918 = vpop.f32.mrf.mxu0
        %v919 = vadd.f32 %v827, %v918
        %v920 = vpop.f32.mrf.mxu0
        %v921 = vpop.f32.mrf.mxu0
        %v922 = vadd.f32 %v827, %v921
        %v923 = vpop.f32.mrf.mxu0
        %924 = vmatprep.mubr.bf16.mxu0 0
        %925 = vmatmul.mubr.bf16.gmra.mxu0 %v817
        %v926 = vpop.f32.mrf.mxu0
        %v927 = vadd.f32 %v827, %v926
        %v928 = vpop.f32.mrf.mxu0
        %v929 = vpop.f32.mrf.mxu0
        %v930 = vadd.f32 %v827, %v929
        %v931 = vpop.f32.mrf.mxu0
        %932 = vmatprep.mubr.bf16.mxu0 0
        %933 = vmatmul.mubr.bf16.gmra.mxu0 %v818
        %v934 = vpop.f32.mrf.mxu0
        %v935 = vadd.f32 %v827, %v934
        %v936 = vpop.f32.mrf.mxu0
        %v937 = vpop.f32.mrf.mxu0
        %v938 = vadd.f32 %v827, %v937
        %v939 = vpop.f32.mrf.mxu0
        %940 = vmatprep.mubr.bf16.mxu0 0
        %941 = vmatmul.mubr.bf16.gmra.mxu0 %v819
        %v942 = vpop.f32.mrf.mxu0
        %v943 = vadd.f32 %v827, %v942
        %v944 = vpop.f32.mrf.mxu0
        %v945 = vpop.f32.mrf.mxu0
        %v946 = vadd.f32 %v827, %v945
        %v947 = vpop.f32.mrf.mxu0
        %948 = vmatprep.mubr.bf16.mxu0 0
        %949 = vmatmul.mubr.bf16.gmra.mxu0 %v820
        %v950 = vpop.f32.mrf.mxu0
        %v951 = vadd.f32 %v827, %v950
        %v952 = vpop.f32.mrf.mxu0
        %v953 = vpop.f32.mrf.mxu0
        %v954 = vadd.f32 %v827, %v953
        %v955 = vpop.f32.mrf.mxu0
        %956 = vmatprep.mubr.bf16.mxu0 0
        %957 = vmatmul.mubr.bf16.gmra.mxu0 %v821
        %v958 = vpop.f32.mrf.mxu0
        %v959 = vadd.f32 %v827, %v958
        %v960 = vpop.f32.mrf.mxu0
        %v961 = vpop.f32.mrf.mxu0
        %v962 = vadd.f32 %v827, %v961
        %v963 = vpop.f32.mrf.mxu0
        %964 = vmatprep.mubr.bf16.mxu0 0
        %965 = vmatmul.mubr.bf16.gmra.mxu0 %v822
        %v966 = vpop.f32.mrf.mxu0
        %v967 = vadd.f32 %v827, %v966
        %v968 = vpop.f32.mrf.mxu0
        %v969 = vpop.f32.mrf.mxu0
        %v970 = vadd.f32 %v827, %v969
        %v971 = vpop.f32.mrf.mxu0
        %972 = vdwg.mxu0
        %973 = vst [vmem:[%s179] sm:$0xff] %v911
        %974 = vst [vmem:[%s179 + $0x8] sm:$0xff] %v914
        %975 = vst [vmem:[%s179 + $0x10] sm:$0xff] %v919
        %976 = vst [vmem:[%s179 + $0x18] sm:$0xff] %v922
        %977 = vst [vmem:[%s179 + $0x20] sm:$0xff] %v927
        %978 = vst [vmem:[%s179 + $0x28] sm:$0xff] %v930
        %979 = vst [vmem:[%s179 + $0x30] sm:$0xff] %v935
        %980 = vst [vmem:[%s179 + $0x38] sm:$0xff] %v938
        %981 = vst [vmem:[%s179 + $0x40] sm:$0xff] %v943
        %982 = vst [vmem:[%s179 + $0x48] sm:$0xff] %v946
        %983 = vst [vmem:[%s179 + $0x50] sm:$0xff] %v951
        %984 = vst [vmem:[%s179 + $0x58] sm:$0xff] %v954
        %985 = vst [vmem:[%s179 + $0x60] sm:$0xff] %v959
        %986 = vst [vmem:[%s179 + $0x68] sm:$0xff] %v962
        %987 = vst [vmem:[%s179 + $0x70] sm:$0xff] %v967
        %988 = vst [vmem:[%s179 + $0x78] sm:$0xff] %v970
        %s989 = sand.u32 %s94, 1
        %s990 = scalar_lea.sflag [#allocation4], %s989
        %s991 = sand.u32 %s94, 1
        %s992 = smul.addr %s991, 128
        %s993 = scalar_lea.vmem [#allocation5], %s992
        // Predicated region
        $region37: #{tpu_custom_call.1} parent=31 // pred_check
          %p994 = pneg %p104
        $region38: #{tpu_custom_call.1} parent=31 // pred_check_branch
          %996 = sbr.rel (%p994) target = $region40
        $region39: #{tpu_custom_call.1} parent=31 // pred_region
          %s997 = smul.u32 16, %s18
          %s999 = ssub.s32 2048, 2048
          %1000 = vsyncadd %s990, %s999
          %s1001 = smul.addr %s997, 128
          %s1002 = scalar_lea.hbm %s3, %s1001
          %s1003 = sshll.u32 %s993, 4
          %s1004 = int_to_ptr.vmem [resolvable:$true] %s1003
          %1009 = dma.vmem_to_hbm [thread:$0]  %s1004, 2048, %s1002, %s990, 128, 128, 8
        $region40: #{tpu_custom_call.1} parent=31 // pred_fallthru
          _
      $region32: #{tpu_custom_call.1} parent=5 // pred_fallthru
        _
      %p1010 = scmp.le.s32.totalorder 2, %s13
      // Predicated region
      $region41: #{tpu_custom_call.1} parent=5 // pred_check
        %p1011 = pneg %p1010
      $region42: #{tpu_custom_call.1} parent=5 // pred_check_branch
        %1013 = sbr.rel (%p1011) target = $region44
      $region43: #{tpu_custom_call.1} parent=5 // pred_region
        %s1014 = ssub.s32 %s13, 2
        // Predicated region
        $region45: #{tpu_custom_call.1} parent=43 // pred_check
          %p1015 = pneg %p110
        $region46: #{tpu_custom_call.1} parent=43 // pred_check_branch
          %1017 = sbr.rel (%p1015) target = $region48
        $region47: #{tpu_custom_call.1} parent=43 // pred_region
          %s1018 = sand.u32 %s95, 1
          %s1019 = scalar_lea.sflag [#allocation4], %s1018
          %s1020 = sand.u32 %s95, 1
          %s1021 = smul.addr %s1020, 128
          %s1022 = scalar_lea.vmem [#allocation5], %s1021
          %1023 = dma.done %s1019, 2048
        $region48: #{tpu_custom_call.1} parent=43 // pred_fallthru
          _
      $region44: #{tpu_custom_call.1} parent=5 // pred_fallthru
        _
    $region6: #{tpu_custom_call.1} parent=1 // loop_footer
      %s17 = sadd.s32 1, %s13
    $region7: #{tpu_custom_call.1} parent=1 // loop_footer_branch
      %12 = sbr.rel target = $region3
    $region8: #{tpu_custom_call.1} parent=1 // loop_exit
      _
    %1024 = vsyncpa [#allocation3], 1
    %s1025 = scalar_lea.sflag [#allocation3], 1
    %1026 = vsyncpa %s1025, 1
    %1027 = vsyncpa [#allocation4], 1
    %s1028 = scalar_lea.sflag [#allocation4], 1
    %1029 = vsyncpa %s1028, 1

</llo_original>
